<compile_context>
chip_gen: v7x
topology: tpu7x:2x2x1
jax: 0.10.0
libtpu: 0.0.40
codegen_flags: <defaults>
</compile_context>

<pallas_src>
import functools

import jax
import jax.numpy as jnp
from jax.experimental import pallas as pl
from jax.experimental.pallas import tpu as pltpu


# --------------------------------- kernel ------------------------------------

def patch_embed_kernel(p_ref, w_ref, b_ref, o_ref):
    # p_ref: (tN, K) matmul_dtype   w_ref: (K, E) matmul_dtype
    # b_ref: (1, E) f32             o_ref: (tN, E) out_dtype
    acc = jnp.dot(p_ref[...], w_ref[...], preferred_element_type=jnp.float32)
    o_ref[...] = (acc + b_ref[...]).astype(o_ref.dtype)


# ------------------------------ pallas wrapper --------------------------------

def _pick_row_tile(n, target=1024):
    """MXU-aligned row tile (multiple of 256 when large).  N is padded up to a
    multiple of the returned tile in the wrapper, so no divisor search."""
    if n >= target:
        return target
    granule = 256 if n >= 256 else 8
    return ((n + granule - 1) // granule) * granule


def patch_embed_forward(
    x,
    weight,
    bias,
    *,
    kernel_size=(16, 16),
    stride=(16, 16),
    padding=(0, 0),
    matmul_dtype=jnp.bfloat16,   # bf16 MXU path (default); f32 = parity/debug mode
    out_dtype=jnp.float32,       # pass jnp.bfloat16 when downstream runs in bf16
):
    """x: (B, Cin, H, W) f32; weight: (E, Cin, kh, kw); bias: (E,).

    Returns (B, Ho, Wo, E) — identical layout/semantics to PatchEmbed.forward.
    """
    B, Cin, H, W = x.shape
    E = weight.shape[0]
    kh, kw = kernel_size
    sh, sw = stride
    ph, pw = padding

    if ph or pw:
        x = jnp.pad(x, ((0, 0), (0, 0), (ph, ph), (pw, pw)))
        H, W = H + 2 * ph, W + 2 * pw

    # TODO(synk): only the non-overlapping case (stride == kernel_size, as used
    # by SAM's PatchEmbed) is lowered; general strided/overlapping im2col is not.
    assert (sh, sw) == (kh, kw) and H % kh == 0 and W % kw == 0
    Ho, Wo = H // kh, W // kw
    N, K = B * Ho * Wo, Cin * kh * kw

    # im2col: one XLA layout pass fused with the bf16 cast (pure patch regroup,
    # no data duplication since kernel == stride).
    patches = (
        x.reshape(B, Cin, Ho, kh, Wo, kw)
        .transpose(0, 2, 4, 1, 3, 5)              # (B, Ho, Wo, Cin, kh, kw)
        .reshape(N, K)
        .astype(matmul_dtype)
    )
    w2d = weight.reshape(E, K).T.astype(matmul_dtype)     # (K, E), MXU-friendly
    b2d = bias.reshape(1, E).astype(jnp.float32)

    tN = _pick_row_tile(N)
    n_steps = pl.cdiv(N, tN)
    N_pad = n_steps * tN
    if N_pad != N:
        patches = jnp.pad(patches, ((0, N_pad - N), (0, 0)))

    out_itemsize = jnp.dtype(out_dtype).itemsize
    bytes_accessed = int(
        N_pad * K * patches.dtype.itemsize
        + K * E * w2d.dtype.itemsize
        + E * 4
        + N_pad * E * out_itemsize
    )
    cost = pl.CostEstimate(
        flops=2 * N_pad * K * E,
        transcendentals=0,
        bytes_accessed=bytes_accessed,
    )

    out = pl.pallas_call(
        patch_embed_kernel,
        out_shape=jax.ShapeDtypeStruct((N_pad, E), out_dtype),
        grid=(n_steps,),
        in_specs=[
            # row tile of patches (pipelined, double-buffered by default)
            pl.BlockSpec((tN, K), lambda i: (i, 0)),
            # weight + bias are grid-resident -> single buffer is enough
            pl.BlockSpec((K, E), lambda i: (0, 0), pipeline_mode=pl.Buffered(1)),
            pl.BlockSpec((1, E), lambda i: (0, 0), pipeline_mode=pl.Buffered(1)),
        ],
        out_specs=pl.BlockSpec((tN, E), lambda i: (i, 0)),  # lane-dense (E % 128 == 0)
        compiler_params=pltpu.CompilerParams(
            dimension_semantics=("parallel",),
        ),
        cost_estimate=cost,
    )(patches, w2d, b2d)

    if N_pad != N:
        out = out[:N]
    # Metadata-only reshape into the NHWC token grid == permute(0, 2, 3, 1).
    return out.reshape(B, Ho, Wo, E)


# ----------------------------------- main --------------------------------------

if __name__ == "__main__":
    B, Cin, H, W = 2, 4, 64, 64
    E = 128
    kernel_size = stride = (16, 16)

    key = jax.random.PRNGKey(0)
    kx, kwt, kb = jax.random.split(key, 3)
    x = jax.random.normal(kx, (B, Cin, H, W), jnp.float32)
    weight = 0.02 * jax.random.normal(
        kwt, (E, Cin, kernel_size[0], kernel_size[1]), jnp.float32)
    bias = 0.02 * jax.random.normal(kb, (E,), jnp.float32)

    Ho, Wo = H // kernel_size[0], W // kernel_size[1]

    # Reference: XLA conv in NHWC output layout.
    ref = jax.lax.conv_general_dilated(
        x, weight, window_strides=stride, padding="VALID",
        dimension_numbers=("NCHW", "OIHW", "NHWC"),
    ) + bias

    # Default path: bf16 MXU operands, f32 accumulation, f32 output.
    fwd = jax.jit(functools.partial(
        patch_embed_forward, kernel_size=kernel_size, stride=stride, padding=(0, 0)))
    y = fwd(x, weight, bias)
    jax.block_until_ready(y)
    assert y.shape == (B, Ho, Wo, E) and y.dtype == jnp.float32
    err = float(jnp.max(jnp.abs(y - ref)))
    assert err < 5e-2, f"max abs err {err}"   # tolerance covers bf16 operand quantization

    # bf16-output fast path (for downstream bf16 ViT blocks).
    fwd_bf16 = jax.jit(functools.partial(
        patch_embed_forward, kernel_size=kernel_size, stride=stride, padding=(0, 0),
        out_dtype=jnp.bfloat16))
    y16 = fwd_bf16(x, weight, bias)
    jax.block_until_ready(y16)
    assert y16.shape == (B, Ho, Wo, E) and y16.dtype == jnp.bfloat16
    err16 = float(jnp.max(jnp.abs(y16.astype(jnp.float32) - ref)))
    assert err16 < 1e-1, f"bf16-out max abs err {err16}"

    print("KERNEL_OK")
</pallas_src>

<mosaic_0001>
module attributes {stable_mosaic.version = 11 : i64} {
  func.func @patch_embed_kernel(%arg0: i32, %arg1: memref<32x1024xbf16, #tpu.memory_space<vmem>>, %arg2: memref<1024x128xbf16, #tpu.memory_space<vmem>>, %arg3: memref<1x128xf32, #tpu.memory_space<vmem>>, %arg4: memref<32x128xf32, #tpu.memory_space<vmem>>) attributes {dimension_semantics = [#tpu.dimension_semantics<parallel>], iteration_bounds = array<i64: 1>, scalar_prefetch = 0 : i64, scratch_operands = 0 : i64, tpu.core_type = #tpu.core_type<tc>, window_params = [{transform_indices = @transform_0, window_bounds = array<i64: 32, 1024>}, {pipeline_mode = #tpu.pipeline_mode<synchronous>, transform_indices = @transform_1, window_bounds = array<i64: 1024, 128>}, {pipeline_mode = #tpu.pipeline_mode<synchronous>, transform_indices = @transform_2, window_bounds = array<i64: 1, 128>}, {transform_indices = @transform_3, window_bounds = array<i64: 32, 128>}]} {
    %c0 = arith.constant 0 : index
    %c0_0 = arith.constant 0 : index
    %0 = vector.load %arg1[%c0, %c0_0] : memref<32x1024xbf16, #tpu.memory_space<vmem>>, vector<32x1024xbf16>
    %c0_1 = arith.constant 0 : index
    %c0_2 = arith.constant 0 : index
    %1 = vector.load %arg2[%c0_1, %c0_2] : memref<1024x128xbf16, #tpu.memory_space<vmem>>, vector<1024x128xbf16>
    %cst = arith.constant dense<0.000000e+00> : vector<32x128xf32>
    %2 = tpu.matmul %0, %1, %cst {dimension_numbers = #tpu.dot_dimension_numbers<[1], [0], [0], [1], [0, 0, 1, 1], [], []>} : vector<32x1024xbf16>, vector<1024x128xbf16>, vector<32x128xf32> -> vector<32x128xf32>
    %c0_3 = arith.constant 0 : index
    %c0_4 = arith.constant 0 : index
    %3 = vector.load %arg3[%c0_3, %c0_4] : memref<1x128xf32, #tpu.memory_space<vmem>>, vector<1x128xf32>
    %4 = vector.broadcast %3 : vector<1x128xf32> to vector<32x128xf32>
    %5 = arith.addf %2, %4 : vector<32x128xf32>
    %c0_5 = arith.constant 0 : index
    %c0_6 = arith.constant 0 : index
    %6 = vector.load %arg4[%c0_5, %c0_6] : memref<32x128xf32, #tpu.memory_space<vmem>>, vector<32x128xf32>
    tpu.vector_store %arg4[%c0_5, %c0_6], %5 {strides = array<i32>} : memref<32x128xf32, #tpu.memory_space<vmem>>, vector<32x128xf32>,
    return
  }
  func.func @transform_0(%arg0: i32) -> (i32, i32) {
    %c0_i32 = arith.constant 0 : i32
    %c0_i32_0 = arith.constant 0 : i32
    return %arg0, %c0_i32 : i32, i32
  }
  func.func @transform_1(%arg0: i32) -> (i32, i32) {
    %c0_i32 = arith.constant 0 : i32
    %c0_i32_0 = arith.constant 0 : i32
    %c0_i32_1 = arith.constant 0 : i32
    return %c0_i32, %c0_i32_0 : i32, i32
  }
  func.func @transform_2(%arg0: i32) -> (i32, i32) {
    %c0_i32 = arith.constant 0 : i32
    %c0_i32_0 = arith.constant 0 : i32
    %c0_i32_1 = arith.constant 0 : i32
    return %c0_i32, %c0_i32_0 : i32, i32
  }
  func.func @transform_3(%arg0: i32) -> (i32, i32) {
    %c0_i32 = arith.constant 0 : i32
    %c0_i32_0 = arith.constant 0 : i32
    return %arg0, %c0_i32 : i32, i32
  }
}

</mosaic_0001>

<llo_original>
// kernel: patch_embed_forward.1
$region0: #{patch_embed_forward.1}
  #allocation0 [shape = 'u32[]', space=smem, size = 0x4, offset = 0x4, fixed_abs, tag = 'smem constant byte address 0x4 - core index']
  #allocation1 [shape = 'u32[144,128]{1,0:T(1,128)}', space=vmem, size = 0x12000, scoped, tag = 'internal scratch']
  %s0 = inlined_call_operand.vmem [shape: bf16[32,1024], index: 0, kind: input, shape index: {}]
  %s1 = inlined_call_operand.vmem [shape: bf16[1024,128], index: 1, kind: input, shape index: {}]
  %s2 = inlined_call_operand.vmem [shape: f32[1,128], index: 2, kind: input, shape index: {}]
  %s3 = inlined_call_operand.hbm [shape: f32[32,128], index: 3, kind: output, shape index: {}]
  %s4 = sld [smem:[#allocation0]]
  $region22: #{patch_embed_forward.1} parent=0
    _
  %s6 = ssub.s32 1, %s4
  %s7 = scalar_select 0, %s6, %s4
  $region1: #{patch_embed_forward.1} parent=0
    #allocation2 [shape = 'u8[16384]{0}', space=vmem, size = 0x4000, scoped, tag = 'output window, operand 0, single buffered']
    #allocation3 [shape = 's32[1]{0}', space=sflag, size = 0x4, scoped, tag = 'scoped memory for patch_embed_forward.1']
    %8 = vsyncpa [#allocation3], 0
    // Predicated region
    $region2: #{patch_embed_forward.1} parent=1 // pred_check
      _
    $region3: #{patch_embed_forward.1} parent=1 // pred_check_branch
      %10 = sbr.rel (0) target = $region5
    $region4: #{patch_embed_forward.1} parent=1 // pred_region
      _
    $region5: #{patch_embed_forward.1} parent=1 // pred_fallthru
      _
    // Predicated region
    $region6: #{patch_embed_forward.1} parent=1 // pred_check
      _
    $region7: #{patch_embed_forward.1} parent=1 // pred_check_branch
      %12 = sbr.rel (0) target = $region9
    $region8: #{patch_embed_forward.1} parent=1 // pred_region
      _
    $region9: #{patch_embed_forward.1} parent=1 // pred_fallthru
      _
    // Predicated region
    $region10: #{patch_embed_forward.1} parent=1 // pred_check
      _
    $region11: #{patch_embed_forward.1} parent=1 // pred_check_branch
      %14 = sbr.rel (0) target = $region13
    $region12: #{patch_embed_forward.1} parent=1 // pred_region
      _
    $region13: #{patch_embed_forward.1} parent=1 // pred_fallthru
      _
    %v16 = vld [vmem:[%s0] sm:$0xff]
    %v17 = vld [vmem:[%s0 + $0x8] sm:$0xff]
    %v18 = vld [vmem:[%s0 + $0x10] sm:$0xff]
    %v19 = vld [vmem:[%s0 + $0x18] sm:$0xff]
    %v20 = vld [vmem:[%s0 + $0x20] sm:$0xff]
    %v21 = vld [vmem:[%s0 + $0x28] sm:$0xff]
    %v22 = vld [vmem:[%s0 + $0x30] sm:$0xff]
    %v23 = vld [vmem:[%s0 + $0x38] sm:$0xff]
    %v24 = vld [vmem:[%s0 + $0x40] sm:$0xff]
    %v25 = vld [vmem:[%s0 + $0x48] sm:$0xff]
    %v26 = vld [vmem:[%s0 + $0x50] sm:$0xff]
    %v27 = vld [vmem:[%s0 + $0x58] sm:$0xff]
    %v28 = vld [vmem:[%s0 + $0x60] sm:$0xff]
    %v29 = vld [vmem:[%s0 + $0x68] sm:$0xff]
    %v30 = vld [vmem:[%s0 + $0x70] sm:$0xff]
    %v31 = vld [vmem:[%s0 + $0x78] sm:$0xff]
    %v32 = vld [vmem:[%s1] sm:$0xf]
    %v33 = vld [vmem:[%s1 + $0x4] sm:$0xf]
    %v34 = vld [vmem:[%s1 + $0x8] sm:$0xf]
    %v35 = vld [vmem:[%s1 + $0xc] sm:$0xf]
    %v36 = vld [vmem:[%s1 + $0x10] sm:$0xf]
    %v37 = vld [vmem:[%s1 + $0x14] sm:$0xf]
    %v38 = vld [vmem:[%s1 + $0x18] sm:$0xf]
    %v39 = vld [vmem:[%s1 + $0x1c] sm:$0xf]
    %v40 = vld [vmem:[%s1 + $0x20] sm:$0xf]
    %v41 = vld [vmem:[%s1 + $0x24] sm:$0xf]
    %v42 = vld [vmem:[%s1 + $0x28] sm:$0xf]
    %v43 = vld [vmem:[%s1 + $0x2c] sm:$0xf]
    %v44 = vld [vmem:[%s1 + $0x30] sm:$0xf]
    %v45 = vld [vmem:[%s1 + $0x34] sm:$0xf]
    %v46 = vld [vmem:[%s1 + $0x38] sm:$0xf]
    %v47 = vld [vmem:[%s1 + $0x3c] sm:$0xf]
    %v48 = vld [vmem:[%s1 + $0x40] sm:$0xf]
    %v49 = vld [vmem:[%s1 + $0x44] sm:$0xf]
    %v50 = vld [vmem:[%s1 + $0x48] sm:$0xf]
    %v51 = vld [vmem:[%s1 + $0x4c] sm:$0xf]
    %v52 = vld [vmem:[%s1 + $0x50] sm:$0xf]
    %v53 = vld [vmem:[%s1 + $0x54] sm:$0xf]
    %v54 = vld [vmem:[%s1 + $0x58] sm:$0xf]
    %v55 = vld [vmem:[%s1 + $0x5c] sm:$0xf]
    %v56 = vld [vmem:[%s1 + $0x60] sm:$0xf]
    %v57 = vld [vmem:[%s1 + $0x64] sm:$0xf]
    %v58 = vld [vmem:[%s1 + $0x68] sm:$0xf]
    %v59 = vld [vmem:[%s1 + $0x6c] sm:$0xf]
    %v60 = vld [vmem:[%s1 + $0x70] sm:$0xf]
    %v61 = vld [vmem:[%s1 + $0x74] sm:$0xf]
    %v62 = vld [vmem:[%s1 + $0x78] sm:$0xf]
    %v63 = vld [vmem:[%s1 + $0x7c] sm:$0xf]
    %v64 = vld [vmem:[%s1 + $0x80] sm:$0xf]
    %v65 = vld [vmem:[%s1 + $0x84] sm:$0xf]
    %v66 = vld [vmem:[%s1 + $0x88] sm:$0xf]
    %v67 = vld [vmem:[%s1 + $0x8c] sm:$0xf]
    %v68 = vld [vmem:[%s1 + $0x90] sm:$0xf]
    %v69 = vld [vmem:[%s1 + $0x94] sm:$0xf]
    %v70 = vld [vmem:[%s1 + $0x98] sm:$0xf]
    %v71 = vld [vmem:[%s1 + $0x9c] sm:$0xf]
    %v72 = vld [vmem:[%s1 + $0xa0] sm:$0xf]
    %v73 = vld [vmem:[%s1 + $0xa4] sm:$0xf]
    %v74 = vld [vmem:[%s1 + $0xa8] sm:$0xf]
    %v75 = vld [vmem:[%s1 + $0xac] sm:$0xf]
    %v76 = vld [vmem:[%s1 + $0xb0] sm:$0xf]
    %v77 = vld [vmem:[%s1 + $0xb4] sm:$0xf]
    %v78 = vld [vmem:[%s1 + $0xb8] sm:$0xf]
    %v79 = vld [vmem:[%s1 + $0xbc] sm:$0xf]
    %v80 = vld [vmem:[%s1 + $0xc0] sm:$0xf]
    %v81 = vld [vmem:[%s1 + $0xc4] sm:$0xf]
    %v82 = vld [vmem:[%s1 + $0xc8] sm:$0xf]
    %v83 = vld [vmem:[%s1 + $0xcc] sm:$0xf]
    %v84 = vld [vmem:[%s1 + $0xd0] sm:$0xf]
    %v85 = vld [vmem:[%s1 + $0xd4] sm:$0xf]
    %v86 = vld [vmem:[%s1 + $0xd8] sm:$0xf]
    %v87 = vld [vmem:[%s1 + $0xdc] sm:$0xf]
    %v88 = vld [vmem:[%s1 + $0xe0] sm:$0xf]
    %v89 = vld [vmem:[%s1 + $0xe4] sm:$0xf]
    %v90 = vld [vmem:[%s1 + $0xe8] sm:$0xf]
    %v91 = vld [vmem:[%s1 + $0xec] sm:$0xf]
    %v92 = vld [vmem:[%s1 + $0xf0] sm:$0xf]
    %v93 = vld [vmem:[%s1 + $0xf4] sm:$0xf]
    %v94 = vld [vmem:[%s1 + $0xf8] sm:$0xf]
    %v95 = vld [vmem:[%s1 + $0xfc] sm:$0xf]
    %v96 = vld [vmem:[%s1 + $0x100] sm:$0xf]
    %v97 = vld [vmem:[%s1 + $0x104] sm:$0xf]
    %v98 = vld [vmem:[%s1 + $0x108] sm:$0xf]
    %v99 = vld [vmem:[%s1 + $0x10c] sm:$0xf]
    %v100 = vld [vmem:[%s1 + $0x110] sm:$0xf]
    %v101 = vld [vmem:[%s1 + $0x114] sm:$0xf]
    %v102 = vld [vmem:[%s1 + $0x118] sm:$0xf]
    %v103 = vld [vmem:[%s1 + $0x11c] sm:$0xf]
    %v104 = vld [vmem:[%s1 + $0x120] sm:$0xf]
    %v105 = vld [vmem:[%s1 + $0x124] sm:$0xf]
    %v106 = vld [vmem:[%s1 + $0x128] sm:$0xf]
    %v107 = vld [vmem:[%s1 + $0x12c] sm:$0xf]
    %v108 = vld [vmem:[%s1 + $0x130] sm:$0xf]
    %v109 = vld [vmem:[%s1 + $0x134] sm:$0xf]
    %v110 = vld [vmem:[%s1 + $0x138] sm:$0xf]
    %v111 = vld [vmem:[%s1 + $0x13c] sm:$0xf]
    %v112 = vld [vmem:[%s1 + $0x140] sm:$0xf]
    %v113 = vld [vmem:[%s1 + $0x144] sm:$0xf]
    %v114 = vld [vmem:[%s1 + $0x148] sm:$0xf]
    %v115 = vld [vmem:[%s1 + $0x14c] sm:$0xf]
    %v116 = vld [vmem:[%s1 + $0x150] sm:$0xf]
    %v117 = vld [vmem:[%s1 + $0x154] sm:$0xf]
    %v118 = vld [vmem:[%s1 + $0x158] sm:$0xf]
    %v119 = vld [vmem:[%s1 + $0x15c] sm:$0xf]
    %v120 = vld [vmem:[%s1 + $0x160] sm:$0xf]
    %v121 = vld [vmem:[%s1 + $0x164] sm:$0xf]
    %v122 = vld [vmem:[%s1 + $0x168] sm:$0xf]
    %v123 = vld [vmem:[%s1 + $0x16c] sm:$0xf]
    %v124 = vld [vmem:[%s1 + $0x170] sm:$0xf]
    %v125 = vld [vmem:[%s1 + $0x174] sm:$0xf]
    %v126 = vld [vmem:[%s1 + $0x178] sm:$0xf]
    %v127 = vld [vmem:[%s1 + $0x17c] sm:$0xf]
    %v128 = vld [vmem:[%s1 + $0x180] sm:$0xf]
    %v129 = vld [vmem:[%s1 + $0x184] sm:$0xf]
    %v130 = vld [vmem:[%s1 + $0x188] sm:$0xf]
    %v131 = vld [vmem:[%s1 + $0x18c] sm:$0xf]
    %v132 = vld [vmem:[%s1 + $0x190] sm:$0xf]
    %v133 = vld [vmem:[%s1 + $0x194] sm:$0xf]
    %v134 = vld [vmem:[%s1 + $0x198] sm:$0xf]
    %v135 = vld [vmem:[%s1 + $0x19c] sm:$0xf]
    %v136 = vld [vmem:[%s1 + $0x1a0] sm:$0xf]
    %v137 = vld [vmem:[%s1 + $0x1a4] sm:$0xf]
    %v138 = vld [vmem:[%s1 + $0x1a8] sm:$0xf]
    %v139 = vld [vmem:[%s1 + $0x1ac] sm:$0xf]
    %v140 = vld [vmem:[%s1 + $0x1b0] sm:$0xf]
    %v141 = vld [vmem:[%s1 + $0x1b4] sm:$0xf]
    %v142 = vld [vmem:[%s1 + $0x1b8] sm:$0xf]
    %v143 = vld [vmem:[%s1 + $0x1bc] sm:$0xf]
    %v144 = vld [vmem:[%s1 + $0x1c0] sm:$0xf]
    %v145 = vld [vmem:[%s1 + $0x1c4] sm:$0xf]
    %v146 = vld [vmem:[%s1 + $0x1c8] sm:$0xf]
    %v147 = vld [vmem:[%s1 + $0x1cc] sm:$0xf]
    %v148 = vld [vmem:[%s1 + $0x1d0] sm:$0xf]
    %v149 = vld [vmem:[%s1 + $0x1d4] sm:$0xf]
    %v150 = vld [vmem:[%s1 + $0x1d8] sm:$0xf]
    %v151 = vld [vmem:[%s1 + $0x1dc] sm:$0xf]
    %v152 = vld [vmem:[%s1 + $0x1e0] sm:$0xf]
    %v153 = vld [vmem:[%s1 + $0x1e4] sm:$0xf]
    %v154 = vld [vmem:[%s1 + $0x1e8] sm:$0xf]
    %v155 = vld [vmem:[%s1 + $0x1ec] sm:$0xf]
    %v156 = vld [vmem:[%s1 + $0x1f0] sm:$0xf]
    %v157 = vld [vmem:[%s1 + $0x1f4] sm:$0xf]
    %v158 = vld [vmem:[%s1 + $0x1f8] sm:$0xf]
    %v159 = vld [vmem:[%s1 + $0x1fc] sm:$0xf]
    %v160 = vld [vmem:[%s2] sm:$0x1]
    %v162 = vlaneseq
    %v163 = vshrl.u32 %v162, 7
    %v164 = vsub.s32 0, %v163
    %v165 = vrot.slane %v160, %v164
    %v183 = vunpack.c.l.b16 %v16
    %v184 = vunpack.c.h.b16 %v16
    %v185 = vunpack.c.l.b16 %v17
    %v186 = vunpack.c.h.b16 %v17
    %v187 = vunpack.c.l.b16 %v18
    %v188 = vunpack.c.h.b16 %v18
    %v189 = vunpack.c.l.b16 %v19
    %v190 = vunpack.c.h.b16 %v19
    %v191 = vunpack.c.l.b16 %v20
    %v192 = vunpack.c.h.b16 %v20
    %v193 = vunpack.c.l.b16 %v21
    %v194 = vunpack.c.h.b16 %v21
    %v195 = vunpack.c.l.b16 %v22
    %v196 = vunpack.c.h.b16 %v22
    %v197 = vunpack.c.l.b16 %v23
    %v198 = vunpack.c.h.b16 %v23
    %v199 = vunpack.c.l.b16 %v24
    %v200 = vunpack.c.h.b16 %v24
    %v201 = vunpack.c.l.b16 %v25
    %v202 = vunpack.c.h.b16 %v25
    %v203 = vunpack.c.l.b16 %v26
    %v204 = vunpack.c.h.b16 %v26
    %v205 = vunpack.c.l.b16 %v27
    %v206 = vunpack.c.h.b16 %v27
    %v207 = vunpack.c.l.b16 %v28
    %v208 = vunpack.c.h.b16 %v28
    %v209 = vunpack.c.l.b16 %v29
    %v210 = vunpack.c.h.b16 %v29
    %v211 = vunpack.c.l.b16 %v30
    %v212 = vunpack.c.h.b16 %v30
    %v213 = vunpack.c.l.b16 %v31
    %v214 = vunpack.c.h.b16 %v31
    %v215 = vpack.c.b16 %v191, %v183
    %v216 = vpack.c.b16 %v192, %v184
    %v217 = vpack.c.b16 %v193, %v185
    %v218 = vpack.c.b16 %v194, %v186
    %v219 = vpack.c.b16 %v195, %v187
    %v220 = vpack.c.b16 %v196, %v188
    %v221 = vpack.c.b16 %v197, %v189
    %v222 = vpack.c.b16 %v198, %v190
    %v223 = vpack.c.b16 %v207, %v199
    %v224 = vpack.c.b16 %v208, %v200
    %v225 = vpack.c.b16 %v209, %v201
    %v226 = vpack.c.b16 %v210, %v202
    %v227 = vpack.c.b16 %v211, %v203
    %v228 = vpack.c.b16 %v212, %v204
    %v229 = vpack.c.b16 %v213, %v205
    %v230 = vpack.c.b16 %v214, %v206
    %v375 = vunpack.c.l.b16 %v32
    %v376 = vunpack.c.l.b16 %v33
    %v377 = vunpack.c.l.b16 %v34
    %v378 = vunpack.c.l.b16 %v35
    %v379 = vunpack.c.l.b16 %v36
    %v380 = vunpack.c.l.b16 %v37
    %v381 = vunpack.c.l.b16 %v38
    %v382 = vunpack.c.l.b16 %v39
    %v383 = vunpack.c.l.b16 %v40
    %v384 = vunpack.c.l.b16 %v41
    %v385 = vunpack.c.l.b16 %v42
    %v386 = vunpack.c.l.b16 %v43
    %v387 = vunpack.c.l.b16 %v44
    %v388 = vunpack.c.l.b16 %v45
    %v389 = vunpack.c.l.b16 %v46
    %v390 = vunpack.c.l.b16 %v47
    %v391 = vunpack.c.l.b16 %v48
    %v392 = vunpack.c.l.b16 %v49
    %v393 = vunpack.c.l.b16 %v50
    %v394 = vunpack.c.l.b16 %v51
    %v395 = vunpack.c.l.b16 %v52
    %v396 = vunpack.c.l.b16 %v53
    %v397 = vunpack.c.l.b16 %v54
    %v398 = vunpack.c.l.b16 %v55
    %v399 = vunpack.c.l.b16 %v56
    %v400 = vunpack.c.l.b16 %v57
    %v401 = vunpack.c.l.b16 %v58
    %v402 = vunpack.c.l.b16 %v59
    %v403 = vunpack.c.l.b16 %v60
    %v404 = vunpack.c.l.b16 %v61
    %v405 = vunpack.c.l.b16 %v62
    %v406 = vunpack.c.l.b16 %v63
    %v407 = vunpack.c.l.b16 %v64
    %v408 = vunpack.c.l.b16 %v65
    %v409 = vunpack.c.l.b16 %v66
    %v410 = vunpack.c.l.b16 %v67
    %v411 = vunpack.c.l.b16 %v68
    %v412 = vunpack.c.l.b16 %v69
    %v413 = vunpack.c.l.b16 %v70
    %v414 = vunpack.c.l.b16 %v71
    %v415 = vunpack.c.l.b16 %v72
    %v416 = vunpack.c.l.b16 %v73
    %v417 = vunpack.c.l.b16 %v74
    %v418 = vunpack.c.l.b16 %v75
    %v419 = vunpack.c.l.b16 %v76
    %v420 = vunpack.c.l.b16 %v77
    %v421 = vunpack.c.l.b16 %v78
    %v422 = vunpack.c.l.b16 %v79
    %v423 = vunpack.c.l.b16 %v80
    %v424 = vunpack.c.l.b16 %v81
    %v425 = vunpack.c.l.b16 %v82
    %v426 = vunpack.c.l.b16 %v83
    %v427 = vunpack.c.l.b16 %v84
    %v428 = vunpack.c.l.b16 %v85
    %v429 = vunpack.c.l.b16 %v86
    %v430 = vunpack.c.l.b16 %v87
    %v431 = vunpack.c.l.b16 %v88
    %v432 = vunpack.c.l.b16 %v89
    %v433 = vunpack.c.l.b16 %v90
    %v434 = vunpack.c.l.b16 %v91
    %v435 = vunpack.c.l.b16 %v92
    %v436 = vunpack.c.l.b16 %v93
    %v437 = vunpack.c.l.b16 %v94
    %v438 = vunpack.c.l.b16 %v95
    %v439 = vunpack.c.l.b16 %v96
    %v440 = vunpack.c.l.b16 %v97
    %v441 = vunpack.c.l.b16 %v98
    %v442 = vunpack.c.l.b16 %v99
    %v443 = vunpack.c.l.b16 %v100
    %v444 = vunpack.c.l.b16 %v101
    %v445 = vunpack.c.l.b16 %v102
    %v446 = vunpack.c.l.b16 %v103
    %v447 = vunpack.c.l.b16 %v104
    %v448 = vunpack.c.l.b16 %v105
    %v449 = vunpack.c.l.b16 %v106
    %v450 = vunpack.c.l.b16 %v107
    %v451 = vunpack.c.l.b16 %v108
    %v452 = vunpack.c.l.b16 %v109
    %v453 = vunpack.c.l.b16 %v110
    %v454 = vunpack.c.l.b16 %v111
    %v455 = vunpack.c.l.b16 %v112
    %v456 = vunpack.c.l.b16 %v113
    %v457 = vunpack.c.l.b16 %v114
    %v458 = vunpack.c.l.b16 %v115
    %v459 = vunpack.c.l.b16 %v116
    %v460 = vunpack.c.l.b16 %v117
    %v461 = vunpack.c.l.b16 %v118
    %v462 = vunpack.c.l.b16 %v119
    %v463 = vunpack.c.l.b16 %v120
    %v464 = vunpack.c.l.b16 %v121
    %v465 = vunpack.c.l.b16 %v122
    %v466 = vunpack.c.l.b16 %v123
    %v467 = vunpack.c.l.b16 %v124
    %v468 = vunpack.c.l.b16 %v125
    %v469 = vunpack.c.l.b16 %v126
    %v470 = vunpack.c.l.b16 %v127
    %v471 = vunpack.c.l.b16 %v128
    %v472 = vunpack.c.l.b16 %v129
    %v473 = vunpack.c.l.b16 %v130
    %v474 = vunpack.c.l.b16 %v131
    %v475 = vunpack.c.l.b16 %v132
    %v476 = vunpack.c.l.b16 %v133
    %v477 = vunpack.c.l.b16 %v134
    %v478 = vunpack.c.l.b16 %v135
    %v479 = vunpack.c.l.b16 %v136
    %v480 = vunpack.c.l.b16 %v137
    %v481 = vunpack.c.l.b16 %v138
    %v482 = vunpack.c.l.b16 %v139
    %v483 = vunpack.c.l.b16 %v140
    %v484 = vunpack.c.l.b16 %v141
    %v485 = vunpack.c.l.b16 %v142
    %v486 = vunpack.c.l.b16 %v143
    %v487 = vunpack.c.l.b16 %v144
    %v488 = vunpack.c.l.b16 %v145
    %v489 = vunpack.c.l.b16 %v146
    %v490 = vunpack.c.l.b16 %v147
    %v491 = vunpack.c.l.b16 %v148
    %v492 = vunpack.c.l.b16 %v149
    %v493 = vunpack.c.l.b16 %v150
    %v494 = vunpack.c.l.b16 %v151
    %v495 = vunpack.c.l.b16 %v152
    %v496 = vunpack.c.l.b16 %v153
    %v497 = vunpack.c.l.b16 %v154
    %v498 = vunpack.c.l.b16 %v155
    %v499 = vunpack.c.l.b16 %v156
    %v500 = vunpack.c.l.b16 %v157
    %v501 = vunpack.c.l.b16 %v158
    %v502 = vunpack.c.l.b16 %v159
    %v503 = vpack.c.b16 %v376, %v375
    %v504 = vpack.c.b16 %v378, %v377
    %v505 = vpack.c.b16 %v380, %v379
    %v506 = vpack.c.b16 %v382, %v381
    %v507 = vpack.c.b16 %v384, %v383
    %v508 = vpack.c.b16 %v386, %v385
    %v509 = vpack.c.b16 %v388, %v387
    %v510 = vpack.c.b16 %v390, %v389
    %v511 = vpack.c.b16 %v392, %v391
    %v512 = vpack.c.b16 %v394, %v393
    %v513 = vpack.c.b16 %v396, %v395
    %v514 = vpack.c.b16 %v398, %v397
    %v515 = vpack.c.b16 %v400, %v399
    %v516 = vpack.c.b16 %v402, %v401
    %v517 = vpack.c.b16 %v404, %v403
    %v518 = vpack.c.b16 %v406, %v405
    %v519 = vpack.c.b16 %v408, %v407
    %v520 = vpack.c.b16 %v410, %v409
    %v521 = vpack.c.b16 %v412, %v411
    %v522 = vpack.c.b16 %v414, %v413
    %v523 = vpack.c.b16 %v416, %v415
    %v524 = vpack.c.b16 %v418, %v417
    %v525 = vpack.c.b16 %v420, %v419
    %v526 = vpack.c.b16 %v422, %v421
    %v527 = vpack.c.b16 %v424, %v423
    %v528 = vpack.c.b16 %v426, %v425
    %v529 = vpack.c.b16 %v428, %v427
    %v530 = vpack.c.b16 %v430, %v429
    %v531 = vpack.c.b16 %v432, %v431
    %v532 = vpack.c.b16 %v434, %v433
    %v533 = vpack.c.b16 %v436, %v435
    %v534 = vpack.c.b16 %v438, %v437
    %v535 = vpack.c.b16 %v440, %v439
    %v536 = vpack.c.b16 %v442, %v441
    %v537 = vpack.c.b16 %v444, %v443
    %v538 = vpack.c.b16 %v446, %v445
    %v539 = vpack.c.b16 %v448, %v447
    %v540 = vpack.c.b16 %v450, %v449
    %v541 = vpack.c.b16 %v452, %v451
    %v542 = vpack.c.b16 %v454, %v453
    %v543 = vpack.c.b16 %v456, %v455
    %v544 = vpack.c.b16 %v458, %v457
    %v545 = vpack.c.b16 %v460, %v459
    %v546 = vpack.c.b16 %v462, %v461
    %v547 = vpack.c.b16 %v464, %v463
    %v548 = vpack.c.b16 %v466, %v465
    %v549 = vpack.c.b16 %v468, %v467
    %v550 = vpack.c.b16 %v470, %v469
    %v551 = vpack.c.b16 %v472, %v471
    %v552 = vpack.c.b16 %v474, %v473
    %v553 = vpack.c.b16 %v476, %v475
    %v554 = vpack.c.b16 %v478, %v477
    %v555 = vpack.c.b16 %v480, %v479
    %v556 = vpack.c.b16 %v482, %v481
    %v557 = vpack.c.b16 %v484, %v483
    %v558 = vpack.c.b16 %v486, %v485
    %v559 = vpack.c.b16 %v488, %v487
    %v560 = vpack.c.b16 %v490, %v489
    %v561 = vpack.c.b16 %v492, %v491
    %v562 = vpack.c.b16 %v494, %v493
    %v563 = vpack.c.b16 %v496, %v495
    %v564 = vpack.c.b16 %v498, %v497
    %v565 = vpack.c.b16 %v500, %v499
    %v566 = vpack.c.b16 %v502, %v501
    %631 = vmatprep.subr.bf16.mxu0 0
    %632 = vmatpush1.bf16.msra.mxu0 %v503
    %633 = vmatprep.subr.bf16.mxu0 0
    %634 = vmatpush1.bf16.msra.mxu0 %v504
    %635 = vmatprep.subr.bf16.mxu0 0
    %636 = vmatpush1.bf16.msra.mxu0 %v505
    %637 = vmatprep.subr.bf16.mxu0 0
    %638 = vmatpush1.bf16.msra.mxu0 %v506
    %639 = vmatprep.subr.bf16.mxu0 0
    %640 = vmatpush1.bf16.msra.mxu0 %v507
    %641 = vmatprep.subr.bf16.mxu0 0
    %642 = vmatpush1.bf16.msra.mxu0 %v508
    %643 = vmatprep.subr.bf16.mxu0 0
    %644 = vmatpush1.bf16.msra.mxu0 %v509
    %645 = vmatprep.subr.bf16.mxu0 0
    %646 = vmatpush1.bf16.msra.mxu0 %v510
    %647 = vmatprep.subr.bf16.mxu0 0
    %648 = vmatpush1.bf16.msra.mxu0 %v511
    %649 = vmatprep.subr.bf16.mxu0 0
    %650 = vmatpush1.bf16.msra.mxu0 %v512
    %651 = vmatprep.subr.bf16.mxu0 0
    %652 = vmatpush1.bf16.msra.mxu0 %v513
    %653 = vmatprep.subr.bf16.mxu0 0
    %654 = vmatpush1.bf16.msra.mxu0 %v514
    %655 = vmatprep.subr.bf16.mxu0 0
    %656 = vmatpush1.bf16.msra.mxu0 %v515
    %657 = vmatprep.subr.bf16.mxu0 0
    %658 = vmatpush1.bf16.msra.mxu0 %v516
    %659 = vmatprep.subr.bf16.mxu0 0
    %660 = vmatpush1.bf16.msra.mxu0 %v517
    %661 = vmatprep.subr.bf16.mxu0 0
    %662 = vmatpush1.bf16.msra.mxu0 %v518
    %663 = vmatprep.mubr.bf16.mxu0 %v216
    %664 = vmatmul.mubr.bf16.gmra.mrb[0].mxu0 %v215
    %v665 = vpop.f32.mrb[0].mxu0
    %v666 = vadd.f32 %v165, %v665
    %v667 = vpop.f32.mrb[0].mxu0
    %v668 = vpop.f32.mrb[0].mxu0
    %v669 = vadd.f32 %v165, %v668
    %v670 = vpop.f32.mrb[0].mxu0
    %671 = vmatprep.mubr.bf16.mxu0 %v224
    %672 = vmatmul.mubr.bf16.gmra.mrb[0].mxu0 %v223
    %v673 = vpop.f32.mrb[0].mxu0
    %v674 = vadd.f32 %v165, %v673
    %v675 = vpop.f32.mrb[0].mxu0
    %v676 = vpop.f32.mrb[0].mxu0
    %v677 = vadd.f32 %v165, %v676
    %v678 = vpop.f32.mrb[0].mxu0
    %679 = vdwg.mxu0
    %680 = vmatprep.subr.bf16.mxu0 0
    %681 = vmatpush1.bf16.msra.mxu0 %v519
    %682 = vmatprep.subr.bf16.mxu0 0
    %683 = vmatpush1.bf16.msra.mxu0 %v520
    %684 = vmatprep.subr.bf16.mxu0 0
    %685 = vmatpush1.bf16.msra.mxu0 %v521
    %686 = vmatprep.subr.bf16.mxu0 0
    %687 = vmatpush1.bf16.msra.mxu0 %v522
    %688 = vmatprep.subr.bf16.mxu0 0
    %689 = vmatpush1.bf16.msra.mxu0 %v523
    %690 = vmatprep.subr.bf16.mxu0 0
    %691 = vmatpush1.bf16.msra.mxu0 %v524
    %692 = vmatprep.subr.bf16.mxu0 0
    %693 = vmatpush1.bf16.msra.mxu0 %v525
    %694 = vmatprep.subr.bf16.mxu0 0
    %695 = vmatpush1.bf16.msra.mxu0 %v526
    %696 = vmatprep.subr.bf16.mxu0 0
    %697 = vmatpush1.bf16.msra.mxu0 %v527
    %698 = vmatprep.subr.bf16.mxu0 0
    %699 = vmatpush1.bf16.msra.mxu0 %v528
    %700 = vmatprep.subr.bf16.mxu0 0
    %701 = vmatpush1.bf16.msra.mxu0 %v529
    %702 = vmatprep.subr.bf16.mxu0 0
    %703 = vmatpush1.bf16.msra.mxu0 %v530
    %704 = vmatprep.subr.bf16.mxu0 0
    %705 = vmatpush1.bf16.msra.mxu0 %v531
    %706 = vmatprep.subr.bf16.mxu0 0
    %707 = vmatpush1.bf16.msra.mxu0 %v532
    %708 = vmatprep.subr.bf16.mxu0 0
    %709 = vmatpush1.bf16.msra.mxu0 %v533
    %710 = vmatprep.subr.bf16.mxu0 0
    %711 = vmatpush1.bf16.msra.mxu0 %v534
    %712 = vmatprep.mubr.bf16.mxu0 %v218
    %713 = vmatmul.mubr.bf16.gmra.mrb[0].mxu0 %v217
    %v714 = vpop.f32.mrb[0].mxu0
    %v715 = vadd.f32 %v666, %v714
    %v716 = vpop.f32.mrb[0].mxu0
    %v717 = vpop.f32.mrb[0].mxu0
    %v718 = vadd.f32 %v669, %v717
    %v719 = vpop.f32.mrb[0].mxu0
    %720 = vmatprep.mubr.bf16.mxu0 %v226
    %721 = vmatmul.mubr.bf16.gmra.mrb[0].mxu0 %v225
    %v722 = vpop.f32.mrb[0].mxu0
    %v723 = vadd.f32 %v674, %v722
    %v724 = vpop.f32.mrb[0].mxu0
    %v725 = vpop.f32.mrb[0].mxu0
    %v726 = vadd.f32 %v677, %v725
    %v727 = vpop.f32.mrb[0].mxu0
    %728 = vdwg.mxu0
    %729 = vmatprep.subr.bf16.mxu0 0
    %730 = vmatpush1.bf16.msra.mxu0 %v535
    %731 = vmatprep.subr.bf16.mxu0 0
    %732 = vmatpush1.bf16.msra.mxu0 %v536
    %733 = vmatprep.subr.bf16.mxu0 0
    %734 = vmatpush1.bf16.msra.mxu0 %v537
    %735 = vmatprep.subr.bf16.mxu0 0
    %736 = vmatpush1.bf16.msra.mxu0 %v538
    %737 = vmatprep.subr.bf16.mxu0 0
    %738 = vmatpush1.bf16.msra.mxu0 %v539
    %739 = vmatprep.subr.bf16.mxu0 0
    %740 = vmatpush1.bf16.msra.mxu0 %v540
    %741 = vmatprep.subr.bf16.mxu0 0
    %742 = vmatpush1.bf16.msra.mxu0 %v541
    %743 = vmatprep.subr.bf16.mxu0 0
    %744 = vmatpush1.bf16.msra.mxu0 %v542
    %745 = vmatprep.subr.bf16.mxu0 0
    %746 = vmatpush1.bf16.msra.mxu0 %v543
    %747 = vmatprep.subr.bf16.mxu0 0
    %748 = vmatpush1.bf16.msra.mxu0 %v544
    %749 = vmatprep.subr.bf16.mxu0 0
    %750 = vmatpush1.bf16.msra.mxu0 %v545
    %751 = vmatprep.subr.bf16.mxu0 0
    %752 = vmatpush1.bf16.msra.mxu0 %v546
    %753 = vmatprep.subr.bf16.mxu0 0
    %754 = vmatpush1.bf16.msra.mxu0 %v547
    %755 = vmatprep.subr.bf16.mxu0 0
    %756 = vmatpush1.bf16.msra.mxu0 %v548
    %757 = vmatprep.subr.bf16.mxu0 0
    %758 = vmatpush1.bf16.msra.mxu0 %v549
    %759 = vmatprep.subr.bf16.mxu0 0
    %760 = vmatpush1.bf16.msra.mxu0 %v550
    %761 = vmatprep.mubr.bf16.mxu0 %v220
    %762 = vmatmul.mubr.bf16.gmra.mrb[0].mxu0 %v219
    %v763 = vpop.f32.mrb[0].mxu0
    %v764 = vadd.f32 %v715, %v763
    %v765 = vpop.f32.mrb[0].mxu0
    %v766 = vpop.f32.mrb[0].mxu0
    %v767 = vadd.f32 %v718, %v766
    %v768 = vpop.f32.mrb[0].mxu0
    %769 = vmatprep.mubr.bf16.mxu0 %v228
    %770 = vmatmul.mubr.bf16.gmra.mrb[0].mxu0 %v227
    %v771 = vpop.f32.mrb[0].mxu0
    %v772 = vadd.f32 %v723, %v771
    %v773 = vpop.f32.mrb[0].mxu0
    %v774 = vpop.f32.mrb[0].mxu0
    %v775 = vadd.f32 %v726, %v774
    %v776 = vpop.f32.mrb[0].mxu0
    %777 = vdwg.mxu0
    %778 = vmatprep.subr.bf16.mxu0 0
    %779 = vmatpush1.bf16.msra.mxu0 %v551
    %780 = vmatprep.subr.bf16.mxu0 0
    %781 = vmatpush1.bf16.msra.mxu0 %v552
    %782 = vmatprep.subr.bf16.mxu0 0
    %783 = vmatpush1.bf16.msra.mxu0 %v553
    %784 = vmatprep.subr.bf16.mxu0 0
    %785 = vmatpush1.bf16.msra.mxu0 %v554
    %786 = vmatprep.subr.bf16.mxu0 0
    %787 = vmatpush1.bf16.msra.mxu0 %v555
    %788 = vmatprep.subr.bf16.mxu0 0
    %789 = vmatpush1.bf16.msra.mxu0 %v556
    %790 = vmatprep.subr.bf16.mxu0 0
    %791 = vmatpush1.bf16.msra.mxu0 %v557
    %792 = vmatprep.subr.bf16.mxu0 0
    %793 = vmatpush1.bf16.msra.mxu0 %v558
    %794 = vmatprep.subr.bf16.mxu0 0
    %795 = vmatpush1.bf16.msra.mxu0 %v559
    %796 = vmatprep.subr.bf16.mxu0 0
    %797 = vmatpush1.bf16.msra.mxu0 %v560
    %798 = vmatprep.subr.bf16.mxu0 0
    %799 = vmatpush1.bf16.msra.mxu0 %v561
    %800 = vmatprep.subr.bf16.mxu0 0
    %801 = vmatpush1.bf16.msra.mxu0 %v562
    %802 = vmatprep.subr.bf16.mxu0 0
    %803 = vmatpush1.bf16.msra.mxu0 %v563
    %804 = vmatprep.subr.bf16.mxu0 0
    %805 = vmatpush1.bf16.msra.mxu0 %v564
    %806 = vmatprep.subr.bf16.mxu0 0
    %807 = vmatpush1.bf16.msra.mxu0 %v565
    %808 = vmatprep.subr.bf16.mxu0 0
    %809 = vmatpush1.bf16.msra.mxu0 %v566
    %810 = vmatprep.mubr.bf16.mxu0 %v222
    %811 = vmatmul.mubr.bf16.gmra.mrb[0].mxu0 %v221
    %v812 = vpop.f32.mrb[0].mxu0
    %v813 = vadd.f32 %v764, %v812
    %v814 = vpop.f32.mrb[0].mxu0
    %v815 = vpop.f32.mrb[0].mxu0
    %v816 = vadd.f32 %v767, %v815
    %v817 = vpop.f32.mrb[0].mxu0
    %818 = vmatprep.mubr.bf16.mxu0 %v230
    %819 = vmatmul.mubr.bf16.gmra.mrb[0].mxu0 %v229
    %v820 = vpop.f32.mrb[0].mxu0
    %v821 = vadd.f32 %v772, %v820
    %v822 = vpop.f32.mrb[0].mxu0
    %v823 = vpop.f32.mrb[0].mxu0
    %v824 = vadd.f32 %v775, %v823
    %v825 = vpop.f32.mrb[0].mxu0
    %826 = vdwg.mxu0
    %827 = vst [vmem:[#allocation2] sm:$0xff] %v813
    %828 = vst [vmem:[#allocation2 + $0x8] sm:$0xff] %v816
    %829 = vst [vmem:[#allocation2 + $0x10] sm:$0xff] %v821
    %830 = vst [vmem:[#allocation2 + $0x18] sm:$0xff] %v824
    // Predicated region
    $region14: #{patch_embed_forward.1} parent=1 // pred_check
      _
    $region15: #{patch_embed_forward.1} parent=1 // pred_check_branch
      %832 = sbr.rel (0) target = $region17
    $region16: #{patch_embed_forward.1} parent=1 // pred_region
      %s834 = ssub.s32 512, 512
      %835 = vsyncadd [#allocation3], %s834
      %s836 = sshll.u32 [#allocation2], 4
      %s837 = int_to_ptr.vmem [resolvable:$true] %s836
      %842 = dma.vmem_to_hbm [thread:$0]  %s837, 512, %s3, [#allocation3], 128, 128, 8
    $region17: #{patch_embed_forward.1} parent=1 // pred_fallthru
      _
    // Predicated region
    $region18: #{patch_embed_forward.1} parent=1 // pred_check
      _
    $region19: #{patch_embed_forward.1} parent=1 // pred_check_branch
      %844 = sbr.rel (0) target = $region21
    $region20: #{patch_embed_forward.1} parent=1 // pred_region
      %845 = dma.done [#allocation3], 512
    $region21: #{patch_embed_forward.1} parent=1 // pred_fallthru
      _
    %846 = vsyncpa [#allocation3], 1

</llo_original>
